<compile_context>
chip_gen: v6e
topology: v6e:2x2x1
jax: 0.10.0
libtpu: 0.0.40
codegen_flags: <defaults>
</compile_context>

<pallas_src>
import functools

import jax
import jax.numpy as jnp
from jax.experimental import pallas as pl
from jax.experimental.pallas import tpu as pltpu


def _ce2d_kernel(logits_ref, targets_ref, out_ref, *,
                 num_classes, ignore_index, h, th, mask_tail):
    t = targets_ref[...]                                   # (TH, W) int32

    # Pass 1: running max over the class axis.  logits_ref[ci] is one (TH, W)
    # class plane; the reduction is elementwise across planes (VPU only).
    minus_inf = jnp.full(t.shape, -jnp.inf, dtype=jnp.float32)

    def max_body(ci, m):
        return jnp.maximum(m, logits_ref[ci].astype(jnp.float32))

    m = jax.lax.fori_loop(0, num_classes, max_body, minus_inf)

    # Pass 2: exp-sum and one-hot gather of the target logit, streaming one class
    # plane at a time -> only plane-sized f32 temps stay live.
    zeros = jnp.zeros(t.shape, dtype=jnp.float32)

    def sum_body(ci, carry):
        se, xt = carry
        xi = logits_ref[ci].astype(jnp.float32) - m        # x_c - max
        se = se + jnp.exp(xi)
        xt = jnp.where(t == ci, xi, xt)                    # (x_t - max) where matched
        return se, xt

    se, xt = jax.lax.fori_loop(0, num_classes, sum_body, (zeros, zeros))

    nll = jnp.log(se) - xt                                 # -log_softmax(x)[t]

    ge0 = t >= 0
    if mask_tail:
        # Rows past H in the last H-tile (block read past array end) are invalid.
        row = jax.lax.broadcasted_iota(jnp.int32, t.shape, 0) + pl.program_id(1) * th
        ge0 = ge0 & (row < h)
    valid = ge0 & (t != ignore_index)

    s_nll = jnp.sum(jnp.where(valid, nll, 0.0))
    n_valid = jnp.sum(valid.astype(jnp.float32))           # exact: < 2**24 per block
    n_ge0 = jnp.sum(ge0.astype(jnp.float32))

    # Per-block partials -> lanes 0..2 of sublane 0 of this block's private output tile.
    lane = jax.lax.broadcasted_iota(jnp.int32, (8, 128), 1)
    sub = jax.lax.broadcasted_iota(jnp.int32, (8, 128), 0)
    tile = jnp.where((sub == 0) & (lane == 0), s_nll, jnp.float32(0.0))
    tile = jnp.where((sub == 0) & (lane == 1), n_valid, tile)
    tile = jnp.where((sub == 0) & (lane == 2), n_ge0, tile)
    out_ref[...] = tile.reshape(1, 1, 8, 128)


def _choose_tile(n, c, h, w, itemsize, target_block_bytes):
    """Pick the H-tile TH: VMEM-budget aware, dtype-sublane aligned, megacore friendly."""
    sm = max(8, 32 // itemsize)            # sublane multiple: f32->8, bf16->16, int8->32
    w_pad = -(-w // 128) * 128             # lane padding of W inside VMEM

    # VMEM bytes per row of TH: double-buffered logits + double-buffered int32 targets
    # + ~8 plane-sized f32 in-kernel temps (m, se, xt, xi, exp, nll, masks, slack).
    per_row = w_pad * (2 * c * itemsize + 2 * 4 + 8 * 4)
    vmem_budget = 40 * 1024 * 1024         # leaves headroom on v7x's 64 MiB VMEM
    th_budget = max(1, vmem_budget // per_row)
    th_target = max(1, target_block_bytes // max(1, c * w * itemsize))

    th = min(th_budget, th_target)
    if th >= h:
        th = h
    else:
        th = max(sm, (th // sm) * sm)
        if th >= h:
            th = h

    # Keep >= 4 grid steps when possible so v7x megacore has work on both cores.
    gh = -(-h // th)
    while n * gh < 4 and th > sm:
        cand = max(sm, ((th // 2) // sm) * sm)
        if cand == th:
            break
        th = cand
        gh = -(-h // th)

    th_pad = -(-th // sm) * sm
    footprint = per_row * th_pad + (1 << 20)
    vmem_limit = min(max(32 * 1024 * 1024, int(footprint * 1.2)), 96 * 1024 * 1024)
    # TODO(synk): if even th=sm overflows v7x's 64 MiB VMEM (huge c*w), block the
    # class axis as well instead of only raising vmem_limit_bytes.
    return th, gh, vmem_limit


def cross_entropy_2d_loss(inputs, targets, ignore_index=255,
                          target_block_bytes=8 * 1024 * 1024):
    """inputs: (n, c, h, w) float logits (f32 or bf16); targets: (n, h, w) int labels."""
    n, c, h, w = inputs.shape
    nt, ht, wt = targets.shape
    if (n, h, w) != (nt, ht, wt):
        # TODO(synk): nearest / bilinear upsampling branches of the PyTorch module
        raise NotImplementedError("only matching spatial shapes are supported")

    t = targets.astype(jnp.int32)
    itemsize = jnp.dtype(inputs.dtype).itemsize

    th, gh, vmem_limit = _choose_tile(n, c, h, w, itemsize, target_block_bytes)
    mask_tail = (gh * th) != h

    out = pl.pallas_call(
        functools.partial(_ce2d_kernel, num_classes=c, ignore_index=ignore_index,
                          h=h, th=th, mask_tail=mask_tail),
        out_shape=jax.ShapeDtypeStruct((n, gh, 8, 128), jnp.float32),
        grid_spec=pltpu.PrefetchScalarGridSpec(
            num_scalar_prefetch=0,
            grid=(n, gh),
            in_specs=[
                pl.BlockSpec((None, c, th, w), lambda ni, hi: (ni, 0, hi, 0)),
                pl.BlockSpec((None, th, w), lambda ni, hi: (ni, hi, 0)),
            ],
            out_specs=pl.BlockSpec((1, 1, 8, 128), lambda ni, hi: (ni, hi, 0, 0)),
        ),
        compiler_params=pltpu.CompilerParams(
            dimension_semantics=("parallel", "parallel"),
            vmem_limit_bytes=vmem_limit,
        ),
    )(inputs, t)

    # Tiny cross-block reduce. Per-block counts are exact f32 integers; sum them
    # as int32 so very large batches (> 2^24 pixels) don't lose exactness.
    part = out[:, :, 0, :]                                  # (n, gh, 128)
    sum_nll = jnp.sum(part[..., 0])
    n_valid = jnp.sum(part[..., 1].astype(jnp.int32)).astype(jnp.float32)
    n_ge0 = jnp.sum(part[..., 2].astype(jnp.int32)).astype(jnp.float32)
    # nll_loss mean over non-ignored, then the module's extra `loss /= mask.sum()`
    return sum_nll / n_valid / n_ge0


def _reference(x, t, ignore_index=255):
    """Pure-JAX reference of the PyTorch forward semantics."""
    n, c, h, w = x.shape
    logp = jax.nn.log_softmax(x.astype(jnp.float32), axis=1)
    logp = jnp.transpose(logp, (0, 2, 3, 1)).reshape(-1, c)
    tf = t.reshape(-1)
    ge0 = tf >= 0
    valid = ge0 & (tf != ignore_index)
    gathered = jnp.take_along_axis(
        logp, jnp.clip(tf, 0, c - 1)[:, None].astype(jnp.int32), axis=1)[:, 0]
    return (-jnp.sum(jnp.where(valid, gathered, 0.0))
            / jnp.sum(valid).astype(jnp.float32)) / jnp.sum(ge0).astype(jnp.float32)


if __name__ == "__main__":
    key = jax.random.PRNGKey(0)

    # Test 1: f32, small shape; tiling heuristic splits H so the grid has >=4 steps.
    k1, k2, k3, key = jax.random.split(key, 4)
    n, c, h, w = 2, 4, 16, 16
    x = jax.random.normal(k1, (n, c, h, w), dtype=jnp.float32)
    t = jax.random.randint(k2, (n, h, w), 0, c, dtype=jnp.int32)
    t = jnp.where(jax.random.bernoulli(k3, 0.1, (n, h, w)), 255, t)

    loss = jax.block_until_ready(cross_entropy_2d_loss(x, t))
    ref = _reference(x, t)
    assert jnp.allclose(loss, ref, rtol=1e-5, atol=1e-6), (float(loss), float(ref))

    # Test 2: f32, non-divisible H tail (exercises tail masking + cross-block
    # partial reduction) by forcing a tiny block budget.
    k1, k2, k3, key = jax.random.split(key, 4)
    n2, c2, h2, w2 = 1, 3, 20, 16
    x2 = jax.random.normal(k1, (n2, c2, h2, w2), dtype=jnp.float32)
    t2 = jax.random.randint(k2, (n2, h2, w2), 0, c2, dtype=jnp.int32)
    t2 = jnp.where(jax.random.bernoulli(k3, 0.1, (n2, h2, w2)), 255, t2)

    loss2 = jax.block_until_ready(
        cross_entropy_2d_loss(x2, t2, target_block_bytes=1024))
    ref2 = _reference(x2, t2)
    assert jnp.allclose(loss2, ref2, rtol=1e-5, atol=1e-6), (float(loss2), float(ref2))

    # Test 3: bf16 logits with multi-block H (exercises the 16-row sublane
    # rounding for sub-32-bit dtypes and the tail mask).
    k1, k2, k3, key = jax.random.split(key, 4)
    n3, c3, h3, w3 = 1, 5, 24, 48
    x3 = jax.random.normal(k1, (n3, c3, h3, w3), dtype=jnp.float32).astype(jnp.bfloat16)
    t3 = jax.random.randint(k2, (n3, h3, w3), 0, c3, dtype=jnp.int32)
    t3 = jnp.where(jax.random.bernoulli(k3, 0.1, (n3, h3, w3)), 255, t3)

    loss3 = jax.block_until_ready(
        cross_entropy_2d_loss(x3, t3, target_block_bytes=1024))
    ref3 = _reference(x3, t3)
    assert jnp.allclose(loss3, ref3, rtol=1e-5, atol=1e-5), (float(loss3), float(ref3))

    print("KERNEL_OK")
</pallas_src>

<mosaic_0001>
module attributes {stable_mosaic.version = 11 : i64} {
  func.func @_ce2d_kernel(%arg0: i32, %arg1: i32, %arg2: memref<1x4x8x16xf32, #tpu.memory_space<vmem>>, %arg3: memref<1x8x16xi32, #tpu.memory_space<vmem>>, %arg4: memref<1x1x8x128xf32, #tpu.memory_space<vmem>>) attributes {dimension_semantics = [#tpu.dimension_semantics<parallel>, #tpu.dimension_semantics<parallel>], iteration_bounds = array<i64: 2, 2>, scalar_prefetch = 0 : i64, scratch_operands = 0 : i64, tpu.core_type = #tpu.core_type<tc>, window_params = [{transform_indices = @transform_0, window_bounds = array<i64: 1, 4, 8, 16>}, {transform_indices = @transform_1, window_bounds = array<i64: 1, 8, 16>}, {transform_indices = @transform_2, window_bounds = array<i64: 1, 1, 8, 128>}]} {
    %c0 = arith.constant 0 : index
    %c0_0 = arith.constant 0 : index
    %c0_1 = arith.constant 0 : index
    %0 = vector.load %arg3[%c0, %c0_0, %c0_1] : memref<1x8x16xi32, #tpu.memory_space<vmem>>, vector<1x8x16xi32>
    %1 = vector.shape_cast %0 : vector<1x8x16xi32> to vector<8x16xi32>
    %cst = arith.constant 0xFF800000 : f32
    %2 = vector.broadcast %cst : f32 to vector<8x16xf32>
    %c0_i32 = arith.constant 0 : i32
    %c4_i32 = arith.constant 4 : i32
    %3 = arith.addi %c0_i32, %c4_i32 : i32
    %c1_i32 = arith.constant 1 : i32
    %4 = scf.for %arg5 = %c0_i32 to %3 step %c1_i32 iter_args(%arg6 = %2) -> (vector<8x16xf32>)  : i32 {
      %c0_23 = arith.constant 0 : index
      %59 = arith.index_cast %arg5 : i32 to index
      %c0_24 = arith.constant 0 : index
      %c0_25 = arith.constant 0 : index
      %60 = vector.load %arg2[%c0_23, %59, %c0_24, %c0_25] : memref<1x4x8x16xf32, #tpu.memory_space<vmem>>, vector<1x1x8x16xf32>
      %61 = vector.shape_cast %60 : vector<1x1x8x16xf32> to vector<8x16xf32>
      %62 = arith.maximumf %arg6, %61 : vector<8x16xf32>
      scf.yield %62 : vector<8x16xf32>
    }
    %c4_i32_2 = arith.constant 4 : i32
    %cst_3 = arith.constant 0.000000e+00 : f32
    %5 = vector.broadcast %cst_3 : f32 to vector<8x16xf32>
    %c0_i32_4 = arith.constant 0 : i32
    %c4_i32_5 = arith.constant 4 : i32
    %6 = arith.addi %c0_i32_4, %c4_i32_5 : i32
    %c1_i32_6 = arith.constant 1 : i32
    %7:2 = scf.for %arg5 = %c0_i32_4 to %6 step %c1_i32_6 iter_args(%arg6 = %5, %arg7 = %5) -> (vector<8x16xf32>, vector<8x16xf32>)  : i32 {
      %c0_23 = arith.constant 0 : index
      %59 = arith.index_cast %arg5 : i32 to index
      %c0_24 = arith.constant 0 : index
      %c0_25 = arith.constant 0 : index
      %60 = vector.load %arg2[%c0_23, %59, %c0_24, %c0_25] : memref<1x4x8x16xf32, #tpu.memory_space<vmem>>, vector<1x1x8x16xf32>
      %61 = vector.shape_cast %60 : vector<1x1x8x16xf32> to vector<8x16xf32>
      %62 = arith.subf %61, %4 : vector<8x16xf32>
      %63 = math.exp %62 : vector<8x16xf32>
      %64 = arith.addf %arg6, %63 : vector<8x16xf32>
      %65 = vector.broadcast %arg5 : i32 to vector<8x16xi32>
      %66 = arith.cmpi eq, %1, %65 : vector<8x16xi32>
      %67 = arith.select %66, %62, %arg7 : vector<8x16xi1>, vector<8x16xf32>
      scf.yield %64, %67 : vector<8x16xf32>, vector<8x16xf32>
    }
    %c4_i32_7 = arith.constant 4 : i32
    %8 = math.log %7#0 : vector<8x16xf32>
    %9 = arith.subf %8, %7#1 : vector<8x16xf32>
    %c0_i32_8 = arith.constant 0 : i32
    %10 = vector.broadcast %c0_i32_8 : i32 to vector<8x16xi32>
    %11 = arith.cmpi sge, %1, %10 : vector<8x16xi32>
    %c255_i32 = arith.constant 255 : i32
    %12 = vector.broadcast %c255_i32 : i32 to vector<8x16xi32>
    %13 = arith.cmpi ne, %1, %12 : vector<8x16xi32>
    %14 = arith.andi %11, %13 : vector<8x16xi1>
    %cst_9 = arith.constant 0.000000e+00 : f32
    %15 = vector.broadcast %cst_9 : f32 to vector<8x16xf32>
    %16 = arith.select %14, %9, %15 : vector<8x16xi1>, vector<8x16xf32>
    %17 = vector.shape_cast %16 : vector<8x16xf32> to vector<1x8x16xf32>
    %cst_10 = arith.constant dense<0.000000e+00> : vector<1xf32>
    %18 = vector.multi_reduction <add>, %17, %cst_10 [1, 2] : vector<1x8x16xf32> to vector<1xf32>
    %19 = vector.shape_cast %18 : vector<1xf32> to vector<1x1x1xf32>
    %20 = vector.extract %19[0, 0, 0] : f32 from vector<1x1x1xf32>
    %21 = arith.extui %14 : vector<8x16xi1> to vector<8x16xi32>
    %22 = arith.sitofp %21 : vector<8x16xi32> to vector<8x16xf32>
    %23 = vector.shape_cast %22 : vector<8x16xf32> to vector<1x8x16xf32>
    %cst_11 = arith.constant dense<0.000000e+00> : vector<1xf32>
    %24 = vector.multi_reduction <add>, %23, %cst_11 [1, 2] : vector<1x8x16xf32> to vector<1xf32>
    %25 = vector.shape_cast %24 : vector<1xf32> to vector<1x1x1xf32>
    %26 = vector.extract %25[0, 0, 0] : f32 from vector<1x1x1xf32>
    %27 = arith.extui %11 : vector<8x16xi1> to vector<8x16xi32>
    %28 = arith.sitofp %27 : vector<8x16xi32> to vector<8x16xf32>
    %29 = vector.shape_cast %28 : vector<8x16xf32> to vector<1x8x16xf32>
    %cst_12 = arith.constant dense<0.000000e+00> : vector<1xf32>
    %30 = vector.multi_reduction <add>, %29, %cst_12 [1, 2] : vector<1x8x16xf32> to vector<1xf32>
    %31 = vector.shape_cast %30 : vector<1xf32> to vector<1x1x1xf32>
    %32 = vector.extract %31[0, 0, 0] : f32 from vector<1x1x1xf32>
    %33 = tpu.iota {dimensions = array<i32: 1>} : vector<8x128xi32>
    %34 = tpu.iota {dimensions = array<i32: 0>} : vector<8x128xi32>
    %c0_i32_13 = arith.constant 0 : i32
    %35 = vector.broadcast %c0_i32_13 : i32 to vector<8x128xi32>
    %36 = arith.cmpi eq, %34, %35 : vector<8x128xi32>
    %c0_i32_14 = arith.constant 0 : i32
    %37 = vector.broadcast %c0_i32_14 : i32 to vector<8x128xi32>
    %38 = arith.cmpi eq, %33, %37 : vector<8x128xi32>
    %39 = arith.andi %36, %38 : vector<8x128xi1>
    %cst_15 = arith.constant 0.000000e+00 : f32
    %40 = vector.broadcast %20 : f32 to vector<8x128xf32>
    %41 = vector.broadcast %cst_15 : f32 to vector<8x128xf32>
    %42 = arith.select %39, %40, %41 : vector<8x128xi1>, vector<8x128xf32>
    %c0_i32_16 = arith.constant 0 : i32
    %43 = vector.broadcast %c0_i32_16 : i32 to vector<8x128xi32>
    %44 = arith.cmpi eq, %34, %43 : vector<8x128xi32>
    %c1_i32_17 = arith.constant 1 : i32
    %45 = vector.broadcast %c1_i32_17 : i32 to vector<8x128xi32>
    %46 = arith.cmpi eq, %33, %45 : vector<8x128xi32>
    %47 = arith.andi %44, %46 : vector<8x128xi1>
    %48 = vector.broadcast %26 : f32 to vector<8x128xf32>
    %49 = arith.select %47, %48, %42 : vector<8x128xi1>, vector<8x128xf32>
    %c0_i32_18 = arith.constant 0 : i32
    %50 = vector.broadcast %c0_i32_18 : i32 to vector<8x128xi32>
    %51 = arith.cmpi eq, %34, %50 : vector<8x128xi32>
    %c2_i32 = arith.constant 2 : i32
    %52 = vector.broadcast %c2_i32 : i32 to vector<8x128xi32>
    %53 = arith.cmpi eq, %33, %52 : vector<8x128xi32>
    %54 = arith.andi %51, %53 : vector<8x128xi1>
    %55 = vector.broadcast %32 : f32 to vector<8x128xf32>
    %56 = arith.select %54, %55, %49 : vector<8x128xi1>, vector<8x128xf32>
    %57 = vector.shape_cast %56 : vector<8x128xf32> to vector<1x1x8x128xf32>
    %c0_19 = arith.constant 0 : index
    %c0_20 = arith.constant 0 : index
    %c0_21 = arith.constant 0 : index
    %c0_22 = arith.constant 0 : index
    %58 = vector.load %arg4[%c0_19, %c0_20, %c0_21, %c0_22] : memref<1x1x8x128xf32, #tpu.memory_space<vmem>>, vector<1x1x8x128xf32>
    tpu.vector_store %arg4[%c0_19, %c0_20, %c0_21, %c0_22], %57 {strides = array<i32>} : memref<1x1x8x128xf32, #tpu.memory_space<vmem>>, vector<1x1x8x128xf32>,
    return
  }
  func.func @transform_0(%arg0: i32, %arg1: i32) -> (i32, i32, i32, i32) {
    %c0_i32 = arith.constant 0 : i32
    %c0_i32_0 = arith.constant 0 : i32
    %c0_i32_1 = arith.constant 0 : i32
    return %arg0, %c0_i32, %arg1, %c0_i32_0 : i32, i32, i32, i32
  }
  func.func @transform_1(%arg0: i32, %arg1: i32) -> (i32, i32, i32) {
    %c0_i32 = arith.constant 0 : i32
    %c0_i32_0 = arith.constant 0 : i32
    return %arg0, %arg1, %c0_i32 : i32, i32, i32
  }
  func.func @transform_2(%arg0: i32, %arg1: i32) -> (i32, i32, i32, i32) {
    %c0_i32 = arith.constant 0 : i32
    %c0_i32_0 = arith.constant 0 : i32
    %c0_i32_1 = arith.constant 0 : i32
    return %arg0, %arg1, %c0_i32, %c0_i32_0 : i32, i32, i32, i32
  }
}

</mosaic_0001>

<llo_original>
// kernel: tpu_custom_call.1
$region0: #{tpu_custom_call.1}
  #allocation0 [shape = 'u32[]', space=smem, size = 0x4, offset = 0x4, fixed_abs, tag = 'smem constant byte address 0x4 - core index']
  #allocation1 [shape = 'u32[144,128]{1,0:T(1,128)}', space=vmem, size = 0x12000, scoped, tag = 'internal scratch']
  %s0 = inlined_call_operand.hbm [shape: f32[2,4,16,16], index: 0, kind: input, shape index: {}]
  %s1 = inlined_call_operand.hbm [shape: s32[2,16,16], index: 1, kind: input, shape index: {}]
  %s2 = inlined_call_operand.hbm [shape: f32[2,2,8,128], index: 2, kind: output, shape index: {}]
  %s3 = sld [smem:[#allocation0]]
  $region63: #{tpu_custom_call.1} parent=0
    _
  %s5 = ssub.s32 1, %s3
  %s6 = scalar_select 0, %s5, %s3
  $region1: #{tpu_custom_call.1} parent=0
    #allocation2 [shape = 'u8[32768]{0}', space=vmem, size = 0x8000, scoped, tag = 'input window, operand 0']
    #allocation3 [shape = 's32[2]{0}', space=sflag, size = 0x8, scoped, tag = 'scoped memory for tpu_custom_call.1']
    #allocation4 [shape = 's32[2]{0}', space=sflag, size = 0x8, scoped, tag = 'scoped memory for tpu_custom_call.1']
    #allocation5 [shape = 'u8[8192]{0}', space=vmem, size = 0x2000, scoped, tag = 'input window, operand 1']
    #allocation6 [shape = 's32[2]{0}', space=sflag, size = 0x8, scoped, tag = 'scoped memory for tpu_custom_call.1']
    #allocation7 [shape = 'u8[8192]{0}', space=vmem, size = 0x2000, scoped, tag = 'output window, operand 0']
    %7 = vsyncpa [#allocation3], 0
    %s8 = scalar_lea.sflag [#allocation3], 1
    %9 = vsyncpa %s8, 0
    %10 = vsyncpa [#allocation6], 0
    %s11 = scalar_lea.sflag [#allocation6], 1
    %12 = vsyncpa %s11, 0
    %13 = vsyncpa [#allocation4], 0
    %s14 = scalar_lea.sflag [#allocation4], 1
    %15 = vsyncpa %s14, 0
    loop: start=0, step=1, limit=6
    $region2: #{tpu_custom_call.1} parent=1 // loop_pre_header
      _
    $region3: #{tpu_custom_call.1} parent=1 // loop_header
      %s17 = sphi 0, %s21
      %p18 = scmp.ge.s32.totalorder %s17, 6
      %s24 = sphi 0, %s36
      %s25 = sphi 0, %s32
      %s26 = sphi 0, %s24
      %s27 = sphi 0, %s25
      %s28 = sphi 0, %s26
      %s29 = sphi 0, %s27
      %s41 = sphi 0, %s43
      %s44 = sphi 0, %s41
      %s45 = sphi 0, %s44
      %s61 = sphi 0, %s45
      %s69 = sphi 0, %s71
      %s72 = sphi 0, %s69
      %s73 = sphi 0, %s72
      %s89 = sphi 0, %s73
      %s97 = sphi 0, %s99
      %s100 = sphi 0, %s97
      %s101 = sphi 0, %s100
      %s117 = sphi 0, %s101
    $region4: #{tpu_custom_call.1} parent=1 // loop_header_branch
      %20 = sbr.rel (%p18) target = $region8
    $region5: #{tpu_custom_call.1} parent=1 // loop_body
      %s22 = ssub.s32 %s17, 1
      %s23 = ssub.s32 %s17, 2
      %s30 = sadd.s32 1, %s25
      %p31 = scmp.ge.s32.totalorder %s30, 2
      %s32 = scalar_select %p31, 0, %s30
      %s33 = sadd.s32 1, %s24
      %s34 = scalar_select %p31, %s33, %s24
      %p35 = scmp.ge.s32.totalorder %s34, 2
      %s36 = scalar_select %p35, 0, %s34
      %s37 = ssub.s32 %s24, %s36
      %s38 = ssub.s32 %s25, %s32
      %s39 = sor.u32 %s37, %s38
      %p40 = scmp.eq.s32.totalorder %s39, 0
      %s42 = sadd.s32 %s41, 1
      %s43 = scalar_select %p40, %s41, %s42
      %p46 = pneg %p40
      %p47 = scmp.eq.s32.totalorder %s17, 3
      %p48 = por %p46, %p47
      %p49 = scmp.ne.s32.totalorder %s41, %s44
      %p50 = scmp.eq.s32.totalorder %s17, 0
      %p51 = por %p49, %p50
      %p52 = scmp.ne.s32.totalorder %s41, %s44
      %p53 = scmp.eq.s32.totalorder %s22, 3
      %p54 = por %p52, %p53
      %p55 = scmp.ne.s32.totalorder %s44, %s45
      %p56 = scmp.eq.s32.totalorder %s22, 0
      %p57 = por %p55, %p56
      %p58 = scmp.ne.s32.totalorder %s44, %s45
      %p59 = scmp.eq.s32.totalorder %s23, 3
      %p60 = por %p58, %p59
      %p62 = scmp.ne.s32.totalorder %s45, %s61
      %p63 = scmp.eq.s32.totalorder %s23, 0
      %p64 = por %p62, %p63
      %s65 = ssub.s32 %s24, %s36
      %s66 = ssub.s32 %s25, %s32
      %s67 = sor.u32 %s65, %s66
      %p68 = scmp.eq.s32.totalorder %s67, 0
      %s70 = sadd.s32 %s69, 1
      %s71 = scalar_select %p68, %s69, %s70
      %p74 = pneg %p68
      %p75 = scmp.eq.s32.totalorder %s17, 3
      %p76 = por %p74, %p75
      %p77 = scmp.ne.s32.totalorder %s69, %s72
      %p78 = scmp.eq.s32.totalorder %s17, 0
      %p79 = por %p77, %p78
      %p80 = scmp.ne.s32.totalorder %s69, %s72
      %p81 = scmp.eq.s32.totalorder %s22, 3
      %p82 = por %p80, %p81
      %p83 = scmp.ne.s32.totalorder %s72, %s73
      %p84 = scmp.eq.s32.totalorder %s22, 0
      %p85 = por %p83, %p84
      %p86 = scmp.ne.s32.totalorder %s72, %s73
      %p87 = scmp.eq.s32.totalorder %s23, 3
      %p88 = por %p86, %p87
      %p90 = scmp.ne.s32.totalorder %s73, %s89
      %p91 = scmp.eq.s32.totalorder %s23, 0
      %p92 = por %p90, %p91
      %s93 = ssub.s32 %s24, %s36
      %s94 = ssub.s32 %s25, %s32
      %s95 = sor.u32 %s93, %s94
      %p96 = scmp.eq.s32.totalorder %s95, 0
      %s98 = sadd.s32 %s97, 1
      %s99 = scalar_select %p96, %s97, %s98
      %p102 = pneg %p96
      %p103 = scmp.eq.s32.totalorder %s17, 3
      %p104 = por %p102, %p103
      %p105 = scmp.ne.s32.totalorder %s97, %s100
      %p106 = scmp.eq.s32.totalorder %s17, 0
      %p107 = por %p105, %p106
      %p108 = scmp.ne.s32.totalorder %s97, %s100
      %p109 = scmp.eq.s32.totalorder %s22, 3
      %p110 = por %p108, %p109
      %p111 = scmp.ne.s32.totalorder %s100, %s101
      %p112 = scmp.eq.s32.totalorder %s22, 0
      %p113 = por %p111, %p112
      %p114 = scmp.ne.s32.totalorder %s100, %s101
      %p115 = scmp.eq.s32.totalorder %s23, 3
      %p116 = por %p114, %p115
      %p118 = scmp.ne.s32.totalorder %s101, %s117
      %p119 = scmp.eq.s32.totalorder %s23, 0
      %p120 = por %p118, %p119
      %p121 = scmp.le.s32.totalorder 1, %s17
      %p122 = scmp.lt.s32.totalorder %s17, 5
      %p123 = pnand %p121, %p122
      %p124 = pneg %p123
      // Predicated region
      $region9: #{tpu_custom_call.1} parent=5 // pred_check
        _
      $region10: #{tpu_custom_call.1} parent=5 // pred_check_branch
        %126 = sbr.rel (%p123) target = $region12
      $region11: #{tpu_custom_call.1} parent=5 // pred_region
        %s127 = ssub.s32 %s17, 1
      $region12: #{tpu_custom_call.1} parent=5 // pred_fallthru
        _
      %p128 = scmp.lt.s32.totalorder %s17, 4
      // Predicated region
      $region13: #{tpu_custom_call.1} parent=5 // pred_check
        %p129 = pneg %p128
      $region14: #{tpu_custom_call.1} parent=5 // pred_check_branch
        %131 = sbr.rel (%p129) target = $region16
      $region15: #{tpu_custom_call.1} parent=5 // pred_region
        // Predicated region
        $region17: #{tpu_custom_call.1} parent=15 // pred_check
          %p132 = pneg %p51
        $region18: #{tpu_custom_call.1} parent=15 // pred_check_branch
          %134 = sbr.rel (%p132) target = $region20
        $region19: #{tpu_custom_call.1} parent=15 // pred_region
          %s135 = sand.u32 %s41, 1
          %s136 = scalar_lea.sflag [#allocation3], %s135
          %s137 = sand.u32 %s41, 1
          %s138 = smul.addr %s137, 32
          %s139 = scalar_lea.vmem [#allocation2], %s138
          %s141 = ssub.s32 512, 512
          %142 = vsyncadd %s136, %s141
          %s143 = smul.addr %s24, 8
          %s144 = sadd.s32 %s25, %s143
          %s145 = smul.addr %s144, 128
          %s146 = scalar_lea.hbm %s0, %s145
          %s147 = sshll.u32 %s139, 4
          %s148 = int_to_ptr.vmem [resolvable:$true] %s147
          %153 = dma.hbm_to_vmem [thread:$0]  %s146, 512, %s148, %s136, 256, 128, 8
        $region20: #{tpu_custom_call.1} parent=15 // pred_fallthru
          _
        // Predicated region
        $region21: #{tpu_custom_call.1} parent=15 // pred_check
          %p154 = pneg %p79
        $region22: #{tpu_custom_call.1} parent=15 // pred_check_branch
          %156 = sbr.rel (%p154) target = $region24
        $region23: #{tpu_custom_call.1} parent=15 // pred_region
          %s157 = sand.u32 %s69, 1
          %s158 = scalar_lea.sflag [#allocation6], %s157
          %s159 = sand.u32 %s69, 1
          %s160 = smul.addr %s159, 8
          %s161 = scalar_lea.vmem [#allocation5], %s160
          %s163 = ssub.s32 128, 128
          %164 = vsyncadd %s158, %s163
          %s165 = smul.addr %s24, 2
          %s166 = sadd.s32 %s25, %s165
          %s167 = smul.addr %s166, 128
          %s168 = scalar_lea.hbm %s1, %s167
          %s170 = sshll.u32 %s161, 4
          %s171 = int_to_ptr.vmem [resolvable:$true] %s170
          %173 = dma.hbm_to_vmem [thread:$0]  %s168, 128, %s171, %s158
        $region24: #{tpu_custom_call.1} parent=15 // pred_fallthru
          _
      $region16: #{tpu_custom_call.1} parent=5 // pred_fallthru
        _
      %p174 = scmp.le.s32.totalorder 1, %s17
      %p175 = scmp.lt.s32.totalorder %s17, 5
      %p176 = pnand %p174, %p175
      %p177 = pneg %p176
      // Predicated region
      $region25: #{tpu_custom_call.1} parent=5 // pred_check
        _
      $region26: #{tpu_custom_call.1} parent=5 // pred_check_branch
        %179 = sbr.rel (%p176) target = $region28
      $region27: #{tpu_custom_call.1} parent=5 // pred_region
        %s180 = ssub.s32 %s17, 1
        %s181 = sand.u32 %s44, 1
        %s182 = scalar_lea.sflag [#allocation3], %s181
        %s183 = sand.u32 %s44, 1
        %s184 = smul.addr %s183, 32
        %s185 = scalar_lea.vmem [#allocation2], %s184
        // Predicated region
        $region29: #{tpu_custom_call.1} parent=27 // pred_check
          %p186 = pneg %p57
        $region30: #{tpu_custom_call.1} parent=27 // pred_check_branch
          %188 = sbr.rel (%p186) target = $region32
        $region31: #{tpu_custom_call.1} parent=27 // pred_region
          %189 = dma.done %s182, 512
        $region32: #{tpu_custom_call.1} parent=27 // pred_fallthru
          _
        %s190 = sand.u32 %s72, 1
        %s191 = scalar_lea.sflag [#allocation6], %s190
        %s192 = sand.u32 %s72, 1
        %s193 = smul.addr %s192, 8
        %s194 = scalar_lea.vmem [#allocation5], %s193
        // Predicated region
        $region33: #{tpu_custom_call.1} parent=27 // pred_check
          %p195 = pneg %p85
        $region34: #{tpu_custom_call.1} parent=27 // pred_check_branch
          %197 = sbr.rel (%p195) target = $region36
        $region35: #{tpu_custom_call.1} parent=27 // pred_region
          %198 = dma.done %s191, 128
        $region36: #{tpu_custom_call.1} parent=27 // pred_fallthru
          _
        %s199 = sand.u32 %s44, 1
        %s200 = scalar_lea.sflag [#allocation3], %s199
        %s201 = sand.u32 %s44, 1
        %s202 = smul.addr %s201, 32
        %s203 = scalar_lea.vmem [#allocation2], %s202
        %p204 = pneg %p57
        %p205 = pneg %p54
        %s206 = sand.u32 %s72, 1
        %s207 = scalar_lea.sflag [#allocation6], %s206
        %s208 = sand.u32 %s72, 1
        %s209 = smul.addr %s208, 8
        %s210 = scalar_lea.vmem [#allocation5], %s209
        %p211 = pneg %p85
        %p212 = pneg %p82
        %p213 = pneg %p113
        %p214 = pneg %p110
        %s215 = sand.u32 %s100, 1
        %s216 = scalar_lea.sflag [#allocation4], %s215
        %s217 = sand.u32 %s100, 1
        %s218 = smul.addr %s217, 8
        %s219 = scalar_lea.vmem [#allocation7], %s218
        %v220 = vld [vmem:[%s194] sm:$0xff]
        loop: start=0, step=1, limit=4
        $region37: #{tpu_custom_call.1} parent=27 // loop_pre_header
          _
        $region38: #{tpu_custom_call.1} parent=27 // loop_header
          %s222 = sphi 0, %s226
          %p223 = scmp.ge.s32.totalorder %s222, 4
          %v227 = vphi -inf, %v231
        $region39: #{tpu_custom_call.1} parent=27 // loop_header_branch
          %225 = sbr.rel (%p223) target = $region43
        $region40: #{tpu_custom_call.1} parent=27 // loop_body
          %s228 = smul.u32 %s222, 8
          %s229 = scalar_lea.vmem %s185, %s228 [#allocation2]
          %v230 = vld [vmem:[%s229] sm:$0xff]
          %v231 = vmax.f32 %v227, %v230
        $region41: #{tpu_custom_call.1} parent=27 // loop_footer
          %s226 = sadd.s32 1, %s222
        $region42: #{tpu_custom_call.1} parent=27 // loop_footer_branch
          %221 = sbr.rel target = $region38
        $region43: #{tpu_custom_call.1} parent=27 // loop_exit
          _
        loop: start=0, step=1, limit=4
        $region44: #{tpu_custom_call.1} parent=27 // loop_pre_header
          _
        $region45: #{tpu_custom_call.1} parent=27 // loop_header
          %s233 = sphi 0, %s237
          %p234 = scmp.ge.s32.totalorder %s233, 4
          %v238 = vphi 0.0, %v246
          %v239 = vphi 0.0, %v249
        $region46: #{tpu_custom_call.1} parent=27 // loop_header_branch
          %236 = sbr.rel (%p234) target = $region50
        $region47: #{tpu_custom_call.1} parent=27 // loop_body
          %s240 = smul.u32 %s233, 8
          %s241 = scalar_lea.vmem %s185, %s240 [#allocation2]
          %v242 = vld [vmem:[%s241] sm:$0xff]
          %v243 = vsub.f32 %v242, %v227
          %v244 = vmul.f32 %v243, 1.442695
          %v245 = vpow.pop %v244
          %v246 = vadd.f32 %v238, %v245
          %v247 = vstv %s233
          %vm248 = vcmp.eq.s32.totalorder %v220, %v247
          %v249 = vsel %vm248, %v243, %v239
        $region48: #{tpu_custom_call.1} parent=27 // loop_footer
          %s237 = sadd.s32 1, %s233
        $region49: #{tpu_custom_call.1} parent=27 // loop_footer_branch
          %232 = sbr.rel target = $region45
        $region50: #{tpu_custom_call.1} parent=27 // loop_exit
          _
        %v250 = vlog2.pop %v238
        %v251 = vmul.f32 %v250, 0.6931472
        %v252 = vsub.f32 %v251, %v239
        %vm253 = vcmp.ge.s32.totalorder %v220, 0
        %vm254 = vcmp.ne.s32.totalorder %v220, 255
        %vm255 = vmand %vm253, %vm254
        %v256 = vsel %vm255, %v252, 0.0
        %vm257 = vcmask 130048
        %v258 = vsel %vm257, %v256, 0.0
        %259 = vadd.xlane.f32.xlu0 %v258
        %v260 = vpop.xlane.xlu0 %259
        %v261 = vrot.slane %v260, 4
        %v262 = vadd.f32 %v260, %v261
        %v263 = vrot.slane %v262, 2
        %v264 = vadd.f32 %v262, %v263
        %v265 = vrot.slane %v264, 1
        %v266 = vadd.f32 %v264, %v265
        %s267 = vtos %v266
        %v268 = vsel %vm255, 1, 0
        %v269 = vcvt.s32.f32 %v268
        %v270 = vsel %vm257, %v269, 0.0
        %271 = vadd.xlane.f32.xlu0 %v270
        %v272 = vpop.xlane.xlu0 %271
        %v273 = vrot.slane %v272, 4
        %v274 = vadd.f32 %v272, %v273
        %v275 = vrot.slane %v274, 2
        %v276 = vadd.f32 %v274, %v275
        %v277 = vrot.slane %v276, 1
        %v278 = vadd.f32 %v276, %v277
        %s279 = vtos %v278
        %v280 = vsel %vm253, 1, 0
        %v281 = vcvt.s32.f32 %v280
        %v282 = vsel %vm257, %v281, 0.0
        %283 = vadd.xlane.f32.xlu0 %v282
        %v284 = vpop.xlane.xlu0 %283
        %v285 = vrot.slane %v284, 4
        %v286 = vadd.f32 %v284, %v285
        %v287 = vrot.slane %v286, 2
        %v288 = vadd.f32 %v286, %v287
        %v289 = vrot.slane %v288, 1
        %v290 = vadd.f32 %v288, %v289
        %s291 = vtos %v290
        %v292 = vlaneseq
        %v293 = vand.u32 %v292, 127
        %v294 = vlaneseq
        %v295 = vshrl.u32 %v294, 7
        %vm296 = vcmp.eq.s32.totalorder %v295, 0
        %vm297 = vcmp.eq.s32.totalorder %v293, 0
        %vm298 = vmand %vm296, %vm297
        %v299 = vstv %s267
        %v300 = vsel %vm298, %v299, 0.0
        %vm301 = vcmp.eq.s32.totalorder %v293, 1
        %vm302 = vmand %vm296, %vm301
        %v303 = vstv %s279
        %v304 = vsel %vm302, %v303, %v300
        %vm305 = vcmp.eq.s32.totalorder %v293, 2
        %vm306 = vmand %vm296, %vm305
        %v307 = vstv %s291
        %v308 = vsel %vm306, %v307, %v304
        %309 = vst [vmem:[%s219] sm:$0xff] %v308
        %s310 = sand.u32 %s100, 1
        %s311 = scalar_lea.sflag [#allocation4], %s310
        %s312 = sand.u32 %s100, 1
        %s313 = smul.addr %s312, 8
        %s314 = scalar_lea.vmem [#allocation7], %s313
        // Predicated region
        $region51: #{tpu_custom_call.1} parent=27 // pred_check
          %p315 = pneg %p110
        $region52: #{tpu_custom_call.1} parent=27 // pred_check_branch
          %317 = sbr.rel (%p315) target = $region54
        $region53: #{tpu_custom_call.1} parent=27 // pred_region
          %s319 = ssub.s32 128, 128
          %320 = vsyncadd %s311, %s319
          %s321 = smul.addr %s26, 2
          %s322 = sadd.s32 %s27, %s321
          %s323 = smul.addr %s322, 128
          %s324 = scalar_lea.hbm %s2, %s323
          %s326 = sshll.u32 %s314, 4
          %s327 = int_to_ptr.vmem [resolvable:$true] %s326
          %329 = dma.vmem_to_hbm [thread:$0]  %s327, 128, %s324, %s311
        $region54: #{tpu_custom_call.1} parent=27 // pred_fallthru
          _
      $region28: #{tpu_custom_call.1} parent=5 // pred_fallthru
        _
      %p330 = scmp.le.s32.totalorder 2, %s17
      // Predicated region
      $region55: #{tpu_custom_call.1} parent=5 // pred_check
        %p331 = pneg %p330
      $region56: #{tpu_custom_call.1} parent=5 // pred_check_branch
        %333 = sbr.rel (%p331) target = $region58
      $region57: #{tpu_custom_call.1} parent=5 // pred_region
        %s334 = ssub.s32 %s17, 2
        // Predicated region
        $region59: #{tpu_custom_call.1} parent=57 // pred_check
          %p335 = pneg %p116
        $region60: #{tpu_custom_call.1} parent=57 // pred_check_branch
          %337 = sbr.rel (%p335) target = $region62
        $region61: #{tpu_custom_call.1} parent=57 // pred_region
          %s338 = sand.u32 %s101, 1
          %s339 = scalar_lea.sflag [#allocation4], %s338
          %s340 = sand.u32 %s101, 1
          %s341 = smul.addr %s340, 8
          %s342 = scalar_lea.vmem [#allocation7], %s341
          %343 = dma.done %s339, 128
        $region62: #{tpu_custom_call.1} parent=57 // pred_fallthru
          _
      $region58: #{tpu_custom_call.1} parent=5 // pred_fallthru
        _
    $region6: #{tpu_custom_call.1} parent=1 // loop_footer
      %s21 = sadd.s32 1, %s17
    $region7: #{tpu_custom_call.1} parent=1 // loop_footer_branch
      %16 = sbr.rel target = $region3
    $region8: #{tpu_custom_call.1} parent=1 // loop_exit
      _
    %344 = vsyncpa [#allocation3], 1
    %s345 = scalar_lea.sflag [#allocation3], 1
    %346 = vsyncpa %s345, 1
    %347 = vsyncpa [#allocation6], 1
    %s348 = scalar_lea.sflag [#allocation6], 1
    %349 = vsyncpa %s348, 1
    %350 = vsyncpa [#allocation4], 1
    %s351 = scalar_lea.sflag [#allocation4], 1
    %352 = vsyncpa %s351, 1

</llo_original>
